<compile_context>
chip_gen: v5e
topology: v5e:2x2
jax: 0.10.0
libtpu: 0.0.40
codegen_flags: <defaults>
</compile_context>

<pallas_src>
import functools

import jax
import jax.numpy as jnp
from jax.experimental import pallas as pl
from jax.experimental.pallas import tpu as pltpu


H_PAD = 128   # hidden_dim 100 padded to a full lane width
C_PAD = 128   # num_classes 4 padded to a full lane width


def _round_up(n, m):
    return ((n + m - 1) // m) * m


def _fused_kernel(x_ref, params_ref, out_ref, *, v_pad, ones_col):
    # x_ref:      [TB, S] int32 token ids
    # params_ref: [v_pad + H_PAD, 128] f32  (W1_eff | W2_eff), biases folded in
    # out_ref:    [TB, C_PAD] f32 (lane-dense); real logits live in columns [:4]
    x = x_ref[...]                                    # [TB, S]
    TB, S = x.shape

    # --- fused gather + sum-pool as vocabulary counts (lane-dense, v_pad lanes) ---
    lane_ids = jax.lax.broadcasted_iota(jnp.int32, (TB, S, v_pad), 2)
    onehot = (x[:, :, None] == lane_ids).astype(jnp.float32)          # [TB, S, v_pad]
    counts = jnp.sum(onehot, axis=1)                                  # [TB, v_pad]
    # TODO(synk): at real S*V, accumulate counts over S chunks with
    # lax.fori_loop(unroll=True) (or switch to a VMEM row gather, O(B*S*D))
    # instead of materializing the full [TB, S, v_pad] one-hot.

    # constant-1 column carries b1 through W1_eff (padded slot, never a real id)
    col = jax.lax.broadcasted_iota(jnp.int32, (TB, v_pad), 1)
    counts = jnp.where(col == ones_col, 1.0, counts)

    # --- static, sublane-aligned slices into the packed parameter buffer ---
    w1e = params_ref[0:v_pad, :]                      # [v_pad, 128]  emb@w1 | b1 row | 1-lane
    w2e = params_ref[v_pad:v_pad + H_PAD, :]          # [128, 128]    w2     | b2 row

    h = jnp.maximum(
        jnp.dot(counts, w1e, preferred_element_type=jnp.float32), 0.0)
    out_ref[...] = jnp.dot(h, w2e, preferred_element_type=jnp.float32)


def prepare_params(embeddings, w1, b1, w2, b2):
    """One-time parameter prep (folding + padding hoisted out of the call path).

    embeddings: [V, D]; w1: [D, H]; b1: [H]; w2: [H, C]; b2: [C]
    (Linear weights stored [in, out], i.e. transposed vs. PyTorch.)
    Returns (packed [v_pad + H_PAD, 128] f32, v_pad, ones_col).
    """
    V, D = embeddings.shape
    _, H = w1.shape
    _, C = w2.shape
    v_pad = _round_up(V + 1, 128)     # +1 reserves the constant-1 (b1) column
    ones_col = V                       # first padded vocab slot carries the "1"
    one_lane = H                       # first padded hidden lane carries "1" into layer 2

    # Layer-1 fold:  pooled @ w1  ==  counts @ (emb @ w1)
    w1_eff = jnp.zeros((v_pad, H_PAD), jnp.float32)
    w1_eff = w1_eff.at[:V, :H].set(
        embeddings.astype(jnp.float32) @ w1.astype(jnp.float32))
    w1_eff = w1_eff.at[ones_col, :H].set(b1.astype(jnp.float32))      # b1 row
    w1_eff = w1_eff.at[ones_col, one_lane].set(1.0)                   # keeps a 1 alive post-ReLU

    w2_eff = jnp.zeros((H_PAD, C_PAD), jnp.float32)
    w2_eff = w2_eff.at[:H, :C].set(w2.astype(jnp.float32))
    w2_eff = w2_eff.at[one_lane, :C].set(b2.astype(jnp.float32))      # b2 row

    # TODO(synk): on v7x store packed in bf16 (keep preferred_element_type=f32 on
    # the dots) for ~3x MXU throughput; needs a looser validation tolerance.
    packed = jnp.concatenate([w1_eff, w2_eff], axis=0)                # [v_pad + 128, 128]
    return packed, v_pad, ones_col


def experimental_network_forward(x, packed, *, v_pad, ones_col, num_classes):
    """x: [B, S] int32 token ids. Returns logits [B, num_classes] f32."""
    B, S = x.shape
    TB = min(128, _round_up(B, 8))                 # batch tile (8-row aligned)
    B_pad = _round_up(B, TB)
    x_p = x.astype(jnp.int32)
    if B_pad != B:
        x_p = jnp.pad(x_p, ((0, B_pad - B), (0, 0)))

    kernel = functools.partial(_fused_kernel, v_pad=v_pad, ones_col=ones_col)
    out = pl.pallas_call(
        kernel,
        out_shape=jax.ShapeDtypeStruct((B_pad, C_PAD), jnp.float32),
        grid=(B_pad // TB,),
        in_specs=[
            pl.BlockSpec((TB, S), lambda i: (i, 0)),                  # ids tile
            pl.BlockSpec((v_pad + H_PAD, C_PAD), lambda i: (0, 0)),   # resident params
        ],
        out_specs=pl.BlockSpec((TB, C_PAD), lambda i: (i, 0)),
        compiler_params=pltpu.CompilerParams(
            dimension_semantics=("parallel",)),     # engages both TCs on v7x
    )(x_p, packed)
    # TODO(synk): at large B the padded f32 [B,128] output dominates HBM traffic;
    # pack 32 rows' 4 logits per 128-lane row (or emit bf16) inside the kernel.
    return out[:B, :num_classes]


def _reference_forward(x, embeddings, w1, b1, w2, b2):
    emb = jnp.take(embeddings.astype(jnp.float32), x, axis=0)
    pooled = jnp.sum(emb, axis=1)
    h = jnp.maximum(pooled @ w1 + b1, 0.0)
    return h @ w2 + b2


if __name__ == "__main__":
    key = jax.random.PRNGKey(0)
    k_emb, k_x, k_w1, k_b1, k_w2, k_b2 = jax.random.split(key, 6)

    # Small, module-consistent shapes.
    vocab_size = 50
    word_vector_length = 32   # embeddings.size(1)
    seq_len = 8
    batch = 8
    hidden_dim = 100          # fixed in the module
    num_classes = 4           # fixed in the module

    embeddings = jax.random.normal(k_emb, (vocab_size, word_vector_length), jnp.float32)
    x = jax.random.randint(k_x, (batch, seq_len), 0, vocab_size, dtype=jnp.int32)

    # Deterministic parameter init (Linear weights stored [in, out]).
    w1 = jax.random.normal(k_w1, (word_vector_length, hidden_dim), jnp.float32) * 0.05
    b1 = jax.random.normal(k_b1, (hidden_dim,), jnp.float32) * 0.05
    w2 = jax.random.normal(k_w2, (hidden_dim, num_classes), jnp.float32) * 0.05
    b2 = jax.random.normal(k_b2, (num_classes,), jnp.float32) * 0.05

    # One-time prep (layer-1 + bias folding, padding, packing) out of the call path.
    packed, v_pad, ones_col = prepare_params(embeddings, w1, b1, w2, b2)

    out = experimental_network_forward(
        x, packed, v_pad=v_pad, ones_col=ones_col, num_classes=num_classes)
    out = jax.block_until_ready(out)

    ref = _reference_forward(x, embeddings, w1, b1, w2, b2)
    assert out.shape == (batch, num_classes)
    # Tolerance slightly loosened vs 1e-4: the emb@w1 fold changes f32 associativity.
    assert jnp.allclose(out, ref, atol=1e-3, rtol=1e-3), "mismatch vs reference"

    print("KERNEL_OK")
</pallas_src>

<mosaic_0001>
module attributes {stable_mosaic.version = 11 : i64} {
  func.func @_fused_kernel(%arg0: i32, %arg1: memref<8x8xi32, #tpu.memory_space<vmem>>, %arg2: memref<256x128xf32, #tpu.memory_space<vmem>>, %arg3: memref<8x128xf32, #tpu.memory_space<vmem>>) attributes {dimension_semantics = [#tpu.dimension_semantics<parallel>], iteration_bounds = array<i64: 1>, scalar_prefetch = 0 : i64, scratch_operands = 0 : i64, tpu.core_type = #tpu.core_type<tc>, window_params = [{transform_indices = @transform_0, window_bounds = array<i64: 8, 8>}, {pipeline_mode = #tpu.pipeline_mode<synchronous>, transform_indices = @transform_1, window_bounds = array<i64: 256, 128>}, {transform_indices = @transform_2, window_bounds = array<i64: 8, 128>}]} {
    %c0 = arith.constant 0 : index
    %c0_0 = arith.constant 0 : index
    %0 = vector.load %arg1[%c0, %c0_0] : memref<8x8xi32, #tpu.memory_space<vmem>>, vector<8x8xi32>
    %1 = tpu.iota {dimensions = array<i32: 2>} : vector<8x8x128xi32>
    %2 = vector.shape_cast %0 : vector<8x8xi32> to vector<8x8x1xi32>
    %3 = vector.broadcast %2 : vector<8x8x1xi32> to vector<8x8x128xi32>
    %4 = arith.cmpi eq, %3, %1 : vector<8x8x128xi32>
    %5 = arith.extui %4 : vector<8x8x128xi1> to vector<8x8x128xi32>
    %6 = arith.sitofp %5 : vector<8x8x128xi32> to vector<8x8x128xf32>
    %cst = arith.constant dense<0.000000e+00> : vector<8x128xf32>
    %7 = vector.multi_reduction <add>, %6, %cst [1] : vector<8x8x128xf32> to vector<8x128xf32>
    %8 = tpu.iota {dimensions = array<i32: 1>} : vector<8x128xi32>
    %c50_i32 = arith.constant 50 : i32
    %9 = vector.broadcast %c50_i32 : i32 to vector<8x128xi32>
    %10 = arith.cmpi eq, %8, %9 : vector<8x128xi32>
    %cst_1 = arith.constant 1.000000e+00 : f32
    %11 = vector.broadcast %cst_1 : f32 to vector<8x128xf32>
    %12 = arith.select %10, %11, %7 : vector<8x128xi1>, vector<8x128xf32>
    %c0_2 = arith.constant 0 : index
    %c0_3 = arith.constant 0 : index
    %13 = vector.load %arg2[%c0_2, %c0_3] : memref<256x128xf32, #tpu.memory_space<vmem>>, vector<128x128xf32>
    %c128 = arith.constant 128 : index
    %c0_4 = arith.constant 0 : index
    %14 = vector.load %arg2[%c128, %c0_4] : memref<256x128xf32, #tpu.memory_space<vmem>>, vector<128x128xf32>
    %cst_5 = arith.constant dense<0.000000e+00> : vector<8x128xf32>
    %15 = tpu.matmul %12, %13, %cst_5 {dimension_numbers = #tpu.dot_dimension_numbers<[1], [0], [0], [1], [0, 0, 1, 1], [], []>} : vector<8x128xf32>, vector<128x128xf32>, vector<8x128xf32> -> vector<8x128xf32>
    %cst_6 = arith.constant 0.000000e+00 : f32
    %16 = vector.broadcast %cst_6 : f32 to vector<8x128xf32>
    %17 = arith.maximumf %15, %16 : vector<8x128xf32>
    %cst_7 = arith.constant dense<0.000000e+00> : vector<8x128xf32>
    %18 = tpu.matmul %17, %14, %cst_7 {dimension_numbers = #tpu.dot_dimension_numbers<[1], [0], [0], [1], [0, 0, 1, 1], [], []>} : vector<8x128xf32>, vector<128x128xf32>, vector<8x128xf32> -> vector<8x128xf32>
    %c0_8 = arith.constant 0 : index
    %c0_9 = arith.constant 0 : index
    %19 = vector.load %arg3[%c0_8, %c0_9] : memref<8x128xf32, #tpu.memory_space<vmem>>, vector<8x128xf32>
    tpu.vector_store %arg3[%c0_8, %c0_9], %18 {strides = array<i32>} : memref<8x128xf32, #tpu.memory_space<vmem>>, vector<8x128xf32>,
    return
  }
  func.func @transform_0(%arg0: i32) -> (i32, i32) {
    %c0_i32 = arith.constant 0 : i32
    %c0_i32_0 = arith.constant 0 : i32
    return %arg0, %c0_i32 : i32, i32
  }
  func.func @transform_1(%arg0: i32) -> (i32, i32) {
    %c0_i32 = arith.constant 0 : i32
    %c0_i32_0 = arith.constant 0 : i32
    %c0_i32_1 = arith.constant 0 : i32
    return %c0_i32, %c0_i32_0 : i32, i32
  }
  func.func @transform_2(%arg0: i32) -> (i32, i32) {
    %c0_i32 = arith.constant 0 : i32
    %c0_i32_0 = arith.constant 0 : i32
    return %arg0, %c0_i32 : i32, i32
  }
}

</mosaic_0001>

<llo_original>
// kernel: tpu_custom_call.1
$region0: #{tpu_custom_call.1}
  #allocation0 [shape = 'u32[]', space=smem, size = 0x4, offset = 0x4, fixed_abs, tag = 'smem constant byte address 0x4 - core index']
  #allocation1 [shape = 'u32[72,128]{1,0:T(1,128)}', space=vmem, size = 0x9000, scoped, tag = 'internal scratch']
  %s0 = inlined_call_operand.hbm [shape: s32[8,8], index: 0, kind: input, shape index: {}]
  %s1 = inlined_call_operand.hbm [shape: f32[256,128], index: 1, kind: input, shape index: {}]
  %s2 = inlined_call_operand.hbm [shape: f32[8,128], index: 2, kind: output, shape index: {}]
  %s3 = sld [smem:[#allocation0]]
  $region26: #{tpu_custom_call.1} parent=0
    _
  %s5 = ssub.s32 1, %s3
  %s6 = scalar_select 0, %s5, %s3
  $region1: #{tpu_custom_call.1} parent=0
    #allocation2 [shape = 'u8[4096]{0}', space=vmem, size = 0x1000, scoped, tag = 'input window, operand 0, single buffered']
    #allocation3 [shape = 's32[1]{0}', space=sflag, size = 0x4, scoped, tag = 'scoped memory for tpu_custom_call.1']
    #allocation4 [shape = 's32[1]{0}', space=sflag, size = 0x4, scoped, tag = 'scoped memory for tpu_custom_call.1']
    #allocation5 [shape = 'u8[131072]{0}', space=vmem, size = 0x20000, scoped, tag = 'input window, operand 1, single buffered']
    #allocation6 [shape = 's32[1]{0}', space=sflag, size = 0x4, scoped, tag = 'scoped memory for tpu_custom_call.1']
    #allocation7 [shape = 'u8[4096]{0}', space=vmem, size = 0x1000, scoped, tag = 'output window, operand 0, single buffered']
    %7 = vsyncpa [#allocation3], 0
    %8 = vsyncpa [#allocation6], 0
    %9 = vsyncpa [#allocation4], 0
    // Predicated region
    $region2: #{tpu_custom_call.1} parent=1 // pred_check
      _
    $region3: #{tpu_custom_call.1} parent=1 // pred_check_branch
      %11 = sbr.rel (0) target = $region5
    $region4: #{tpu_custom_call.1} parent=1 // pred_region
      %13 = vsyncadd [#allocation3], 0
      %s15 = sshll.u32 %s0, 4
      %s16 = int_to_ptr.hbm [resolvable:$true] %s15
      %s17 = sshll.u32 [#allocation2], 4
      %s18 = int_to_ptr.vmem [resolvable:$true] %s17
      %20 = dma.hbm_to_vmem [thread:$0]  %s16, 128, %s18, [#allocation3]
    $region5: #{tpu_custom_call.1} parent=1 // pred_fallthru
      _
    // Predicated region
    $region6: #{tpu_custom_call.1} parent=1 // pred_check
      _
    $region7: #{tpu_custom_call.1} parent=1 // pred_check_branch
      %22 = sbr.rel (0) target = $region9
    $region8: #{tpu_custom_call.1} parent=1 // pred_region
      %24 = vsyncadd [#allocation6], 0
      %s25 = sshll.u32 %s1, 4
      %s26 = int_to_ptr.hbm [resolvable:$true] %s25
      %s27 = sshll.u32 [#allocation5], 4
      %s28 = int_to_ptr.vmem [resolvable:$true] %s27
      %33 = dma.hbm_to_vmem [thread:$0]  %s26, 4096, %s28, [#allocation6], 128, 128, 8
    $region9: #{tpu_custom_call.1} parent=1 // pred_fallthru
      _
    // Predicated region
    $region10: #{tpu_custom_call.1} parent=1 // pred_check
      _
    $region11: #{tpu_custom_call.1} parent=1 // pred_check_branch
      %35 = sbr.rel (0) target = $region13
    $region12: #{tpu_custom_call.1} parent=1 // pred_region
      %37 = dma.done [#allocation3], 128
    $region13: #{tpu_custom_call.1} parent=1 // pred_fallthru
      _
    // Predicated region
    $region14: #{tpu_custom_call.1} parent=1 // pred_check
      _
    $region15: #{tpu_custom_call.1} parent=1 // pred_check_branch
      %39 = sbr.rel (0) target = $region17
    $region16: #{tpu_custom_call.1} parent=1 // pred_region
      %41 = dma.done [#allocation6], 4096
    $region17: #{tpu_custom_call.1} parent=1 // pred_fallthru
      _
    %v42 = vld [vmem:[#allocation2] sm:$0xff]
    %v43 = vlaneseq
    %v44 = vand.u32 %v43, 127
    %v45 = vperm.slane %v42, 0
    %v46 = vlaneseq
    %v47 = vshrl.u32 %v46, 7
    %49 = vset.pattern.permute.xlu0 %v47
    %50 = vperm.xlu0 %49, %v45
    %v51 = vpop.permute.xlu0 %50
    %v52 = vperm.slane %v42, 1
    %v53 = vlaneseq
    %v54 = vshrl.u32 %v53, 7
    %56 = vset.pattern.permute.xlu0 %v54
    %57 = vperm.xlu0 %56, %v52
    %v58 = vpop.permute.xlu0 %57
    %v59 = vperm.slane %v42, 2
    %v60 = vlaneseq
    %v61 = vshrl.u32 %v60, 7
    %63 = vset.pattern.permute.xlu0 %v61
    %64 = vperm.xlu0 %63, %v59
    %v65 = vpop.permute.xlu0 %64
    %v66 = vperm.slane %v42, 3
    %v67 = vlaneseq
    %v68 = vshrl.u32 %v67, 7
    %70 = vset.pattern.permute.xlu0 %v68
    %71 = vperm.xlu0 %70, %v66
    %v72 = vpop.permute.xlu0 %71
    %v73 = vperm.slane %v42, 4
    %v74 = vlaneseq
    %v75 = vshrl.u32 %v74, 7
    %77 = vset.pattern.permute.xlu0 %v75
    %78 = vperm.xlu0 %77, %v73
    %v79 = vpop.permute.xlu0 %78
    %v80 = vperm.slane %v42, 5
    %v81 = vlaneseq
    %v82 = vshrl.u32 %v81, 7
    %84 = vset.pattern.permute.xlu0 %v82
    %85 = vperm.xlu0 %84, %v80
    %v86 = vpop.permute.xlu0 %85
    %v87 = vperm.slane %v42, 6
    %v88 = vlaneseq
    %v89 = vshrl.u32 %v88, 7
    %91 = vset.pattern.permute.xlu0 %v89
    %92 = vperm.xlu0 %91, %v87
    %v93 = vpop.permute.xlu0 %92
    %v94 = vperm.slane %v42, 7
    %v95 = vlaneseq
    %v96 = vshrl.u32 %v95, 7
    %98 = vset.pattern.permute.xlu0 %v96
    %99 = vperm.xlu0 %98, %v94
    %v100 = vpop.permute.xlu0 %99
    %vm101 = vcmp.eq.s32.totalorder %v51, %v44
    %vm102 = vcmp.eq.s32.totalorder %v58, %v44
    %vm103 = vcmp.eq.s32.totalorder %v65, %v44
    %vm104 = vcmp.eq.s32.totalorder %v72, %v44
    %vm105 = vcmp.eq.s32.totalorder %v79, %v44
    %vm106 = vcmp.eq.s32.totalorder %v86, %v44
    %vm107 = vcmp.eq.s32.totalorder %v93, %v44
    %vm108 = vcmp.eq.s32.totalorder %v100, %v44
    %v109 = vsel %vm101, 1, 0
    %v110 = vsel %vm102, 1, 0
    %v111 = vsel %vm103, 1, 0
    %v112 = vsel %vm104, 1, 0
    %v113 = vsel %vm105, 1, 0
    %v114 = vsel %vm106, 1, 0
    %v115 = vsel %vm107, 1, 0
    %v116 = vsel %vm108, 1, 0
    %v117 = vcvt.s32.f32 %v109
    %v118 = vcvt.s32.f32 %v110
    %v119 = vcvt.s32.f32 %v111
    %v120 = vcvt.s32.f32 %v112
    %v121 = vcvt.s32.f32 %v113
    %v122 = vcvt.s32.f32 %v114
    %v123 = vcvt.s32.f32 %v115
    %v124 = vcvt.s32.f32 %v116
    %v125 = vrot.slane %v117, 4
    %v126 = vadd.f32 %v117, %v125
    %v127 = vrot.slane %v126, 2
    %v128 = vadd.f32 %v126, %v127
    %v129 = vrot.slane %v128, 1
    %v130 = vadd.f32 %v128, %v129
    %v131 = vrot.slane %v118, 4
    %v132 = vadd.f32 %v118, %v131
    %v133 = vrot.slane %v132, 2
    %v134 = vadd.f32 %v132, %v133
    %v135 = vrot.slane %v134, 1
    %v136 = vadd.f32 %v134, %v135
    %v137 = vrot.slane %v119, 4
    %v138 = vadd.f32 %v119, %v137
    %v139 = vrot.slane %v138, 2
    %v140 = vadd.f32 %v138, %v139
    %v141 = vrot.slane %v140, 1
    %v142 = vadd.f32 %v140, %v141
    %v143 = vrot.slane %v120, 4
    %v144 = vadd.f32 %v120, %v143
    %v145 = vrot.slane %v144, 2
    %v146 = vadd.f32 %v144, %v145
    %v147 = vrot.slane %v146, 1
    %v148 = vadd.f32 %v146, %v147
    %v149 = vrot.slane %v121, 4
    %v150 = vadd.f32 %v121, %v149
    %v151 = vrot.slane %v150, 2
    %v152 = vadd.f32 %v150, %v151
    %v153 = vrot.slane %v152, 1
    %v154 = vadd.f32 %v152, %v153
    %v155 = vrot.slane %v122, 4
    %v156 = vadd.f32 %v122, %v155
    %v157 = vrot.slane %v156, 2
    %v158 = vadd.f32 %v156, %v157
    %v159 = vrot.slane %v158, 1
    %v160 = vadd.f32 %v158, %v159
    %v161 = vrot.slane %v123, 4
    %v162 = vadd.f32 %v123, %v161
    %v163 = vrot.slane %v162, 2
    %v164 = vadd.f32 %v162, %v163
    %v165 = vrot.slane %v164, 1
    %v166 = vadd.f32 %v164, %v165
    %v167 = vrot.slane %v124, 4
    %v168 = vadd.f32 %v124, %v167
    %v169 = vrot.slane %v168, 2
    %v170 = vadd.f32 %v168, %v169
    %v171 = vrot.slane %v170, 1
    %v172 = vadd.f32 %v170, %v171
    %vm173 = vcmp.eq.s32.totalorder %v44, 50
    %vm182 = vcmask 1041409
    %v183 = vsel %vm182, %v136, %v130
    %vm184 = vcmask 1042434
    %v185 = vsel %vm184, %v142, %v183
    %vm186 = vcmask 1043459
    %v187 = vsel %vm186, %v148, %v185
    %vm188 = vcmask 1044484
    %v189 = vsel %vm188, %v154, %v187
    %vm190 = vcmask 1045509
    %v191 = vsel %vm190, %v160, %v189
    %vm192 = vcmask 1046534
    %v193 = vsel %vm192, %v166, %v191
    %vm194 = vcmask 1047559
    %v195 = vsel %vm194, %v172, %v193
    %v197 = vsel %vm173, 1.0, %v195
    %v198 = vld [vmem:[#allocation5] sm:$0xff]
    %v199 = vld [vmem:[#allocation5 + $0x8] sm:$0xff]
    %v200 = vld [vmem:[#allocation5 + $0x10] sm:$0xff]
    %v201 = vld [vmem:[#allocation5 + $0x18] sm:$0xff]
    %v202 = vld [vmem:[#allocation5 + $0x20] sm:$0xff]
    %v203 = vld [vmem:[#allocation5 + $0x28] sm:$0xff]
    %v204 = vld [vmem:[#allocation5 + $0x30] sm:$0xff]
    %v205 = vld [vmem:[#allocation5 + $0x38] sm:$0xff]
    %v206 = vld [vmem:[#allocation5 + $0x40] sm:$0xff]
    %v207 = vld [vmem:[#allocation5 + $0x48] sm:$0xff]
    %v208 = vld [vmem:[#allocation5 + $0x50] sm:$0xff]
    %v209 = vld [vmem:[#allocation5 + $0x58] sm:$0xff]
    %v210 = vld [vmem:[#allocation5 + $0x60] sm:$0xff]
    %v211 = vld [vmem:[#allocation5 + $0x68] sm:$0xff]
    %v212 = vld [vmem:[#allocation5 + $0x70] sm:$0xff]
    %v213 = vld [vmem:[#allocation5 + $0x78] sm:$0xff]
    %v214 = vld [vmem:[#allocation5 + $0x80] sm:$0xff]
    %v215 = vld [vmem:[#allocation5 + $0x88] sm:$0xff]
    %v216 = vld [vmem:[#allocation5 + $0x90] sm:$0xff]
    %v217 = vld [vmem:[#allocation5 + $0x98] sm:$0xff]
    %v218 = vld [vmem:[#allocation5 + $0xa0] sm:$0xff]
    %v219 = vld [vmem:[#allocation5 + $0xa8] sm:$0xff]
    %v220 = vld [vmem:[#allocation5 + $0xb0] sm:$0xff]
    %v221 = vld [vmem:[#allocation5 + $0xb8] sm:$0xff]
    %v222 = vld [vmem:[#allocation5 + $0xc0] sm:$0xff]
    %v223 = vld [vmem:[#allocation5 + $0xc8] sm:$0xff]
    %v224 = vld [vmem:[#allocation5 + $0xd0] sm:$0xff]
    %v225 = vld [vmem:[#allocation5 + $0xd8] sm:$0xff]
    %v226 = vld [vmem:[#allocation5 + $0xe0] sm:$0xff]
    %v227 = vld [vmem:[#allocation5 + $0xe8] sm:$0xff]
    %v228 = vld [vmem:[#allocation5 + $0xf0] sm:$0xff]
    %v229 = vld [vmem:[#allocation5 + $0xf8] sm:$0xff]
    %230 = vmatpush.msra.mxu0 %v213
    %231 = vmatpush.msra.mxu0 %v212
    %232 = vmatpush.msra.mxu0 %v211
    %233 = vmatpush.msra.mxu0 %v210
    %234 = vmatpush.msra.mxu0 %v209
    %235 = vmatpush.msra.mxu0 %v208
    %236 = vmatpush.msra.mxu0 %v207
    %237 = vmatpush.msra.mxu0 %v206
    %238 = vmatpush.msra.mxu0 %v205
    %239 = vmatpush.msra.mxu0 %v204
    %240 = vmatpush.msra.mxu0 %v203
    %241 = vmatpush.msra.mxu0 %v202
    %242 = vmatpush.msra.mxu0 %v201
    %243 = vmatpush.msra.mxu0 %v200
    %244 = vmatpush.msra.mxu0 %v199
    %245 = vmatpush.msra.mxu0 %v198
    %246 = vmatmul.f32.gmra.mxu0 %v197
    %v247 = vpop.f32.mrf.mxu0
    %v248 = vadd.f32 0.0, %v247
    %249 = vdwg.mxu0
    %v250 = vmax.f32 %v248, 0.0
    %251 = vmatpush.msra.mxu0 %v229
    %252 = vmatpush.msra.mxu0 %v228
    %253 = vmatpush.msra.mxu0 %v227
    %254 = vmatpush.msra.mxu0 %v226
    %255 = vmatpush.msra.mxu0 %v225
    %256 = vmatpush.msra.mxu0 %v224
    %257 = vmatpush.msra.mxu0 %v223
    %258 = vmatpush.msra.mxu0 %v222
    %259 = vmatpush.msra.mxu0 %v221
    %260 = vmatpush.msra.mxu0 %v220
    %261 = vmatpush.msra.mxu0 %v219
    %262 = vmatpush.msra.mxu0 %v218
    %263 = vmatpush.msra.mxu0 %v217
    %264 = vmatpush.msra.mxu0 %v216
    %265 = vmatpush.msra.mxu0 %v215
    %266 = vmatpush.msra.mxu0 %v214
    %267 = vmatmul.f32.gmra.mxu0 %v250
    %v268 = vpop.f32.mrf.mxu0
    %v269 = vadd.f32 0.0, %v268
    %270 = vdwg.mxu0
    %271 = vst [vmem:[#allocation7] sm:$0xff] %v269
    // Predicated region
    $region18: #{tpu_custom_call.1} parent=1 // pred_check
      _
    $region19: #{tpu_custom_call.1} parent=1 // pred_check_branch
      %273 = sbr.rel (0) target = $region21
    $region20: #{tpu_custom_call.1} parent=1 // pred_region
      %275 = vsyncadd [#allocation4], 0
      %s277 = sshll.u32 [#allocation7], 4
      %s278 = int_to_ptr.vmem [resolvable:$true] %s277
      %s279 = sshll.u32 %s2, 4
      %s280 = int_to_ptr.hbm [resolvable:$true] %s279
      %282 = dma.vmem_to_hbm [thread:$0]  %s278, 128, %s280, [#allocation4]
    $region21: #{tpu_custom_call.1} parent=1 // pred_fallthru
      _
    // Predicated region
    $region22: #{tpu_custom_call.1} parent=1 // pred_check
      _
    $region23: #{tpu_custom_call.1} parent=1 // pred_check_branch
      %284 = sbr.rel (0) target = $region25
    $region24: #{tpu_custom_call.1} parent=1 // pred_region
      %286 = dma.done [#allocation4], 128
    $region25: #{tpu_custom_call.1} parent=1 // pred_fallthru
      _
    %287 = vsyncpa [#allocation3], 1
    %288 = vsyncpa [#allocation6], 1
    %289 = vsyncpa [#allocation4], 1

</llo_original>
